<compile_context>
chip_gen: v5e
topology: v5e:2x2
jax: 0.10.0
libtpu: 0.0.40
codegen_flags: <defaults>
</compile_context>

<pallas_src>
import functools

import numpy as np
import jax
import jax.numpy as jnp
from jax import lax
from jax.experimental import pallas as pl
from jax.experimental.pallas import tpu as pltpu

EPS = 1e-5


def _bottleneck_kernel(x_ref, w1_ref, g1_ref, b1_ref,
                       w2_ref, g2_ref, b2_ref,
                       w3_ref, g3_ref, b3_ref, mask_ref,
                       o_ref, taps_ref, *, B, H, W, P, rate, mm_dtype):
    N = B * H * W
    inv_n = 1.0 / N

    def mm(w, y):
        # Single 2-D MXU matmul: (Cout, Cin) @ (Cin, N), f32 accumulation.
        return jnp.dot(w.astype(mm_dtype), y.astype(mm_dtype),
                       preferred_element_type=jnp.float32)

    def bn(y, g, b, relu):
        # Training-mode BatchNorm over the folded (B*H*W) lane axis, per channel.
        # Two-pass (centered) variance to avoid E[x^2]-E[x]^2 cancellation.
        mean = jnp.sum(y, axis=1, keepdims=True) * inv_n            # (C, 1)
        c = y - mean
        var = jnp.sum(c * c, axis=1, keepdims=True) * inv_n
        out = c * (g * lax.rsqrt(var + EPS)) + b
        return jnp.maximum(out, 0.0) if relu else out

    x = x_ref[...].astype(jnp.float32)                              # (4P, N)

    # ---- conv1 (1x1) + bn1 + relu ----
    h = bn(mm(w1_ref[...], x), g1_ref[...], b1_ref[...], True)     # (P, N)

    # ---- conv2: 3x3, dilation=rate, padding=rate, stride=1 ----
    # Each tap is a circular lane roll of h on the flat (B*H*W) axis; the 0/1 masks zero
    # every wrapped / out-of-image / cross-batch read, making the roll exact.  Taps are
    # stacked into a (9P, N) VMEM scratch and contracted in ONE matmul with K = 9P.
    masks = mask_ref[...]                                           # (9, N)
    for di in range(3):
        for dj in range(3):
            k = di * 3 + dj
            s = (di - 1) * rate * W + (dj - 1) * rate               # flat source offset
            if s == 0:
                tap = h                                             # center tap: always valid
            else:
                tap = pltpu.roll(h, shift=(-s) % N, axis=1) * masks[k:k + 1, :]
            taps_ref[k * P:(k + 1) * P, :] = tap
    h = bn(mm(w2_ref[...], taps_ref[...]), g2_ref[...], b2_ref[...], True)   # (P, N)

    # ---- conv3 (1x1) + bn3, identity residual, relu ----
    h = bn(mm(w3_ref[...], h), g3_ref[...], b3_ref[...], False)    # (4P, N)
    o_ref[...] = jnp.maximum(h + x, 0.0).astype(o_ref.dtype)


def _make_tap_masks(B, H, W, rate):
    """Host-side static 0/1 masks (9, B*HW): 1 where the tap's source pixel is inside the
    image (the conv's zero padding); zeros every wrapped / cross-batch read of the roll."""
    HW = H * W
    yy, xx = np.meshgrid(np.arange(H), np.arange(W), indexing="ij")
    yy = yy.reshape(-1)
    xx = xx.reshape(-1)
    m = np.zeros((9, HW), np.float32)
    for di in range(3):
        for dj in range(3):
            oy, ox = (di - 1) * rate, (dj - 1) * rate
            ok = ((yy + oy >= 0) & (yy + oy < H) & (xx + ox >= 0) & (xx + ox < W))
            m[di * 3 + dj] = ok.astype(np.float32)
    return np.tile(m, (1, B))          # same mask per image, batches adjacent on the lane axis


def atrous_bottleneck(x_nchw, params, rate=1, matmul_dtype=jnp.float32):
    """x_nchw: (B, Cin, H, W) with Cin == 4*planes (downsample=None, stride=1)."""
    w1, g1, b1, w2, g2, b2, w3, g3, b3 = params
    B, Cin, H, W = x_nchw.shape
    P = w1.shape[1]
    assert Cin == 4 * P, "identity shortcut requires inplanes == 4*planes"
    HW = H * W
    N = B * HW

    # Layout plumbing only: fold batch into the flat spatial (lane) axis -> (C, B*HW).
    x = jnp.transpose(x_nchw.reshape(B, Cin, HW), (1, 0, 2)).reshape(Cin, N)
    w1T = jnp.transpose(w1)                                        # (P, 4P)
    # HWIO -> (Cout, kh, kw, Cin) -> (P, 9P): fused single-K weight for the 9 taps.
    w2f = jnp.transpose(w2, (3, 0, 1, 2)).reshape(P, 9 * P)
    w3T = jnp.transpose(w3)                                        # (4P, P)
    g1c, b1c = g1.reshape(-1, 1), b1.reshape(-1, 1)
    g2c, b2c = g2.reshape(-1, 1), b2.reshape(-1, 1)
    g3c, b3c = g3.reshape(-1, 1), b3.reshape(-1, 1)
    masks = jnp.asarray(_make_tap_masks(B, H, W, rate))            # (9, N)

    kernel = functools.partial(_bottleneck_kernel, B=B, H=H, W=W, P=P, rate=rate,
                               mm_dtype=matmul_dtype)
    vspec = pl.BlockSpec(memory_space=pltpu.MemorySpace.VMEM)

    mm_flops = 2 * N * (Cin * P + 9 * P * P + P * 4 * P)
    ew_flops = N * (10 * P + 10 * P + 10 * 4 * P + 9 * P)          # BN/ReLU/mask/residual
    bytes_accessed = 4 * (2 * N * Cin + Cin * P + 9 * P * P + 4 * P * P
                          + 2 * (2 * P + 4 * P) + 9 * N)

    out = pl.pallas_call(
        kernel,
        out_shape=jax.ShapeDtypeStruct((Cin, N), jnp.float32),
        in_specs=[vspec] * 11,
        out_specs=vspec,
        scratch_shapes=[pltpu.VMEM((9 * P, N), jnp.float32)],
        compiler_params=pltpu.CompilerParams(vmem_limit_bytes=32 * 1024 * 1024),
        cost_estimate=pl.CostEstimate(flops=int(mm_flops + ew_flops),
                                      transcendentals=int(6 * P),
                                      bytes_accessed=int(bytes_accessed)),
    )(x, w1T, g1c, b1c, w2f, g2c, b2c, w3T, g3c, b3c, masks)

    return jnp.transpose(out.reshape(Cin, B, HW), (1, 0, 2)).reshape(B, Cin, H, W)


def reference(x_nchw, params, rate=1):
    """Pure-JAX reference (lax conv) for numerical verification."""
    w1, g1, b1, w2, g2, b2, w3, g3, b3 = params
    x = jnp.transpose(x_nchw, (0, 2, 3, 1)).astype(jnp.float32)

    def bn(y, g, b):
        m = jnp.mean(y, axis=(0, 1, 2), keepdims=True)
        v = jnp.mean(jnp.square(y - m), axis=(0, 1, 2), keepdims=True)
        return (y - m) * lax.rsqrt(v + EPS) * g.reshape(1, 1, 1, -1) + b.reshape(1, 1, 1, -1)

    dn = ('NHWC', 'HWIO', 'NHWC')
    h = lax.conv_general_dilated(x, w1.reshape(1, 1, *w1.shape), (1, 1), 'VALID',
                                 dimension_numbers=dn)
    h = jax.nn.relu(bn(h, g1, b1))
    h = lax.conv_general_dilated(h, w2, (1, 1), ((rate, rate), (rate, rate)),
                                 rhs_dilation=(rate, rate), dimension_numbers=dn)
    h = jax.nn.relu(bn(h, g2, b2))
    h = lax.conv_general_dilated(h, w3.reshape(1, 1, *w3.shape), (1, 1), 'VALID',
                                 dimension_numbers=dn)
    h = bn(h, g3, b3)
    out = jax.nn.relu(h + x)
    return jnp.transpose(out, (0, 3, 1, 2))


def make_params(key, inplanes, planes):
    """Deterministic synthetic parameters (shapes from Atrous_Bottleneck.__init__)."""
    ks = jax.random.split(key, 9)
    P = planes
    w1 = jax.random.normal(ks[0], (inplanes, P), jnp.float32) * 0.1       # 1x1: (Cin, Cout)
    w2 = jax.random.normal(ks[1], (3, 3, P, P), jnp.float32) * 0.1        # 3x3: HWIO
    w3 = jax.random.normal(ks[2], (P, 4 * P), jnp.float32) * 0.1          # 1x1: (Cin, Cout)
    g1 = 1.0 + 0.1 * jax.random.normal(ks[3], (1, P), jnp.float32)
    b1 = 0.1 * jax.random.normal(ks[4], (1, P), jnp.float32)
    g2 = 1.0 + 0.1 * jax.random.normal(ks[5], (1, P), jnp.float32)
    b2 = 0.1 * jax.random.normal(ks[6], (1, P), jnp.float32)
    g3 = 1.0 + 0.1 * jax.random.normal(ks[7], (1, 4 * P), jnp.float32)
    b3 = 0.1 * jax.random.normal(ks[8], (1, 4 * P), jnp.float32)
    return (w1, g1, b1, w2, g2, b2, w3, g3, b3)


if __name__ == "__main__":
    key = jax.random.PRNGKey(0)
    k_x, k_p = jax.random.split(key)

    B, planes, H, W = 2, 4, 16, 16
    inplanes = planes * 4          # identity shortcut (downsample=None)
    rate = 2                       # exercise atrous dilation
    # TODO(synk): stride>1 / downsample branch not implemented (module defaults: None, stride=1).

    x = jax.random.normal(k_x, (B, inplanes, H, W), jnp.float32)   # NCHW, like PyTorch
    params = make_params(k_p, inplanes, planes)
    ref = jax.block_until_ready(reference(x, params, rate=rate))

    # f32 matmul operands: tight check against the f32 reference.
    out = jax.block_until_ready(
        atrous_bottleneck(x, params, rate=rate, matmul_dtype=jnp.float32))
    np.testing.assert_allclose(np.asarray(out), np.asarray(ref), rtol=2e-4, atol=2e-4)

    # bf16 matmul operands (v6e/v7x MXU-throughput path, f32 accumulation): loose check.
    out_bf16 = jax.block_until_ready(
        atrous_bottleneck(x, params, rate=rate, matmul_dtype=jnp.bfloat16))
    np.testing.assert_allclose(np.asarray(out_bf16), np.asarray(ref), rtol=1e-1, atol=1e-1)

    print("KERNEL_OK")
</pallas_src>

<mosaic_0001>
module attributes {stable_mosaic.version = 11 : i64} {
  func.func @_bottleneck_kernel(%arg0: memref<16x512xf32, #tpu.memory_space<vmem>>, %arg1: memref<4x16xf32, #tpu.memory_space<vmem>>, %arg2: memref<4x1xf32, #tpu.memory_space<vmem>>, %arg3: memref<4x1xf32, #tpu.memory_space<vmem>>, %arg4: memref<4x36xf32, #tpu.memory_space<vmem>>, %arg5: memref<4x1xf32, #tpu.memory_space<vmem>>, %arg6: memref<4x1xf32, #tpu.memory_space<vmem>>, %arg7: memref<16x4xf32, #tpu.memory_space<vmem>>, %arg8: memref<16x1xf32, #tpu.memory_space<vmem>>, %arg9: memref<16x1xf32, #tpu.memory_space<vmem>>, %arg10: memref<9x512xf32, #tpu.memory_space<vmem>>, %arg11: memref<16x512xf32, #tpu.memory_space<vmem>>, %arg12: memref<36x512xf32, #tpu.memory_space<vmem>>) attributes {dimension_semantics = [], scalar_prefetch = 0 : i64, scratch_operands = 1 : i64, tpu.core_type = #tpu.core_type<tc>} {
    %c0 = arith.constant 0 : index
    %c0_0 = arith.constant 0 : index
    %0 = vector.load %arg0[%c0, %c0_0] : memref<16x512xf32, #tpu.memory_space<vmem>>, vector<16x512xf32>
    %c0_1 = arith.constant 0 : index
    %c0_2 = arith.constant 0 : index
    %1 = vector.load %arg1[%c0_1, %c0_2] : memref<4x16xf32, #tpu.memory_space<vmem>>, vector<4x16xf32>
    %cst = arith.constant dense<0.000000e+00> : vector<4x512xf32>
    %2 = tpu.matmul %1, %0, %cst {dimension_numbers = #tpu.dot_dimension_numbers<[1], [0], [0], [1], [0, 0, 1, 1], [], []>} : vector<4x16xf32>, vector<16x512xf32>, vector<4x512xf32> -> vector<4x512xf32>
    %c0_3 = arith.constant 0 : index
    %c0_4 = arith.constant 0 : index
    %3 = vector.load %arg2[%c0_3, %c0_4] : memref<4x1xf32, #tpu.memory_space<vmem>>, vector<4x1xf32>
    %c0_5 = arith.constant 0 : index
    %c0_6 = arith.constant 0 : index
    %4 = vector.load %arg3[%c0_5, %c0_6] : memref<4x1xf32, #tpu.memory_space<vmem>>, vector<4x1xf32>
    %cst_7 = arith.constant dense<0.000000e+00> : vector<4xf32>
    %5 = vector.multi_reduction <add>, %2, %cst_7 [1] : vector<4x512xf32> to vector<4xf32>
    %6 = vector.shape_cast %5 : vector<4xf32> to vector<4x1xf32>
    %cst_8 = arith.constant 0.001953125 : f32
    %7 = vector.broadcast %cst_8 : f32 to vector<4x1xf32>
    %8 = arith.mulf %6, %7 : vector<4x1xf32>
    %9 = vector.broadcast %8 : vector<4x1xf32> to vector<4x512xf32>
    %10 = arith.subf %2, %9 : vector<4x512xf32>
    %11 = arith.mulf %10, %10 : vector<4x512xf32>
    %cst_9 = arith.constant dense<0.000000e+00> : vector<4xf32>
    %12 = vector.multi_reduction <add>, %11, %cst_9 [1] : vector<4x512xf32> to vector<4xf32>
    %13 = vector.shape_cast %12 : vector<4xf32> to vector<4x1xf32>
    %cst_10 = arith.constant 0.001953125 : f32
    %14 = vector.broadcast %cst_10 : f32 to vector<4x1xf32>
    %15 = arith.mulf %13, %14 : vector<4x1xf32>
    %cst_11 = arith.constant 9.99999974E-6 : f32
    %16 = vector.broadcast %cst_11 : f32 to vector<4x1xf32>
    %17 = arith.addf %15, %16 : vector<4x1xf32>
    %18 = math.rsqrt %17 : vector<4x1xf32>
    %19 = arith.mulf %3, %18 : vector<4x1xf32>
    %20 = vector.broadcast %19 : vector<4x1xf32> to vector<4x512xf32>
    %21 = arith.mulf %10, %20 : vector<4x512xf32>
    %22 = vector.broadcast %4 : vector<4x1xf32> to vector<4x512xf32>
    %23 = arith.addf %21, %22 : vector<4x512xf32>
    %cst_12 = arith.constant 0.000000e+00 : f32
    %24 = vector.broadcast %cst_12 : f32 to vector<4x512xf32>
    %25 = arith.maximumf %23, %24 : vector<4x512xf32>
    %c0_13 = arith.constant 0 : index
    %c0_14 = arith.constant 0 : index
    %26 = vector.load %arg10[%c0_13, %c0_14] : memref<9x512xf32, #tpu.memory_space<vmem>>, vector<9x512xf32>
    %c34_i32 = arith.constant 34 : i32
    %27 = tpu.dynamic_rotate %25 by %c34_i32 dim 1 : vector<4x512xf32>, i32 -> vector<4x512xf32>
    %28 = vector.extract_strided_slice %26 {offsets = [0, 0], sizes = [1, 512], strides = [1, 1]} : vector<9x512xf32> to vector<1x512xf32>
    %29 = vector.broadcast %28 : vector<1x512xf32> to vector<4x512xf32>
    %30 = arith.mulf %27, %29 : vector<4x512xf32>
    %c0_15 = arith.constant 0 : index
    %c0_16 = arith.constant 0 : index
    %31 = vector.load %arg12[%c0_15, %c0_16] : memref<36x512xf32, #tpu.memory_space<vmem>>, vector<4x512xf32>
    tpu.vector_store %arg12[%c0_15, %c0_16], %30 {strides = array<i32>} : memref<36x512xf32, #tpu.memory_space<vmem>>, vector<4x512xf32>,
    %c32_i32 = arith.constant 32 : i32
    %32 = tpu.dynamic_rotate %25 by %c32_i32 dim 1 : vector<4x512xf32>, i32 -> vector<4x512xf32>
    %33 = vector.extract_strided_slice %26 {offsets = [1, 0], sizes = [1, 512], strides = [1, 1]} : vector<9x512xf32> to vector<1x512xf32>
    %34 = vector.broadcast %33 : vector<1x512xf32> to vector<4x512xf32>
    %35 = arith.mulf %32, %34 : vector<4x512xf32>
    %c4 = arith.constant 4 : index
    %c0_17 = arith.constant 0 : index
    %36 = vector.load %arg12[%c4, %c0_17] : memref<36x512xf32, #tpu.memory_space<vmem>>, vector<4x512xf32>
    tpu.vector_store %arg12[%c4, %c0_17], %35 {strides = array<i32>} : memref<36x512xf32, #tpu.memory_space<vmem>>, vector<4x512xf32>,
    %c30_i32 = arith.constant 30 : i32
    %37 = tpu.dynamic_rotate %25 by %c30_i32 dim 1 : vector<4x512xf32>, i32 -> vector<4x512xf32>
    %38 = vector.extract_strided_slice %26 {offsets = [2, 0], sizes = [1, 512], strides = [1, 1]} : vector<9x512xf32> to vector<1x512xf32>
    %39 = vector.broadcast %38 : vector<1x512xf32> to vector<4x512xf32>
    %40 = arith.mulf %37, %39 : vector<4x512xf32>
    %c8 = arith.constant 8 : index
    %c0_18 = arith.constant 0 : index
    %41 = vector.load %arg12[%c8, %c0_18] : memref<36x512xf32, #tpu.memory_space<vmem>>, vector<4x512xf32>
    tpu.vector_store %arg12[%c8, %c0_18], %40 {strides = array<i32>} : memref<36x512xf32, #tpu.memory_space<vmem>>, vector<4x512xf32>,
    %c2_i32 = arith.constant 2 : i32
    %42 = tpu.dynamic_rotate %25 by %c2_i32 dim 1 : vector<4x512xf32>, i32 -> vector<4x512xf32>
    %43 = vector.extract_strided_slice %26 {offsets = [3, 0], sizes = [1, 512], strides = [1, 1]} : vector<9x512xf32> to vector<1x512xf32>
    %44 = vector.broadcast %43 : vector<1x512xf32> to vector<4x512xf32>
    %45 = arith.mulf %42, %44 : vector<4x512xf32>
    %c12 = arith.constant 12 : index
    %c0_19 = arith.constant 0 : index
    %46 = vector.load %arg12[%c12, %c0_19] : memref<36x512xf32, #tpu.memory_space<vmem>>, vector<4x512xf32>
    tpu.vector_store %arg12[%c12, %c0_19], %45 {strides = array<i32>} : memref<36x512xf32, #tpu.memory_space<vmem>>, vector<4x512xf32>,
    %c16 = arith.constant 16 : index
    %c0_20 = arith.constant 0 : index
    %47 = vector.load %arg12[%c16, %c0_20] : memref<36x512xf32, #tpu.memory_space<vmem>>, vector<4x512xf32>
    tpu.vector_store %arg12[%c16, %c0_20], %25 {strides = array<i32>} : memref<36x512xf32, #tpu.memory_space<vmem>>, vector<4x512xf32>,
    %c510_i32 = arith.constant 510 : i32
    %48 = tpu.dynamic_rotate %25 by %c510_i32 dim 1 : vector<4x512xf32>, i32 -> vector<4x512xf32>
    %49 = vector.extract_strided_slice %26 {offsets = [5, 0], sizes = [1, 512], strides = [1, 1]} : vector<9x512xf32> to vector<1x512xf32>
    %50 = vector.broadcast %49 : vector<1x512xf32> to vector<4x512xf32>
    %51 = arith.mulf %48, %50 : vector<4x512xf32>
    %c20 = arith.constant 20 : index
    %c0_21 = arith.constant 0 : index
    %52 = vector.load %arg12[%c20, %c0_21] : memref<36x512xf32, #tpu.memory_space<vmem>>, vector<4x512xf32>
    tpu.vector_store %arg12[%c20, %c0_21], %51 {strides = array<i32>} : memref<36x512xf32, #tpu.memory_space<vmem>>, vector<4x512xf32>,
    %c482_i32 = arith.constant 482 : i32
    %53 = tpu.dynamic_rotate %25 by %c482_i32 dim 1 : vector<4x512xf32>, i32 -> vector<4x512xf32>
    %54 = vector.extract_strided_slice %26 {offsets = [6, 0], sizes = [1, 512], strides = [1, 1]} : vector<9x512xf32> to vector<1x512xf32>
    %55 = vector.broadcast %54 : vector<1x512xf32> to vector<4x512xf32>
    %56 = arith.mulf %53, %55 : vector<4x512xf32>
    %c24 = arith.constant 24 : index
    %c0_22 = arith.constant 0 : index
    %57 = vector.load %arg12[%c24, %c0_22] : memref<36x512xf32, #tpu.memory_space<vmem>>, vector<4x512xf32>
    tpu.vector_store %arg12[%c24, %c0_22], %56 {strides = array<i32>} : memref<36x512xf32, #tpu.memory_space<vmem>>, vector<4x512xf32>,
    %c480_i32 = arith.constant 480 : i32
    %58 = tpu.dynamic_rotate %25 by %c480_i32 dim 1 : vector<4x512xf32>, i32 -> vector<4x512xf32>
    %59 = vector.extract_strided_slice %26 {offsets = [7, 0], sizes = [1, 512], strides = [1, 1]} : vector<9x512xf32> to vector<1x512xf32>
    %60 = vector.broadcast %59 : vector<1x512xf32> to vector<4x512xf32>
    %61 = arith.mulf %58, %60 : vector<4x512xf32>
    %c28 = arith.constant 28 : index
    %c0_23 = arith.constant 0 : index
    %62 = vector.load %arg12[%c28, %c0_23] : memref<36x512xf32, #tpu.memory_space<vmem>>, vector<4x512xf32>
    tpu.vector_store %arg12[%c28, %c0_23], %61 {strides = array<i32>} : memref<36x512xf32, #tpu.memory_space<vmem>>, vector<4x512xf32>,
    %c478_i32 = arith.constant 478 : i32
    %63 = tpu.dynamic_rotate %25 by %c478_i32 dim 1 : vector<4x512xf32>, i32 -> vector<4x512xf32>
    %64 = vector.extract_strided_slice %26 {offsets = [8, 0], sizes = [1, 512], strides = [1, 1]} : vector<9x512xf32> to vector<1x512xf32>
    %65 = vector.broadcast %64 : vector<1x512xf32> to vector<4x512xf32>
    %66 = arith.mulf %63, %65 : vector<4x512xf32>
    %c32 = arith.constant 32 : index
    %c0_24 = arith.constant 0 : index
    %67 = vector.load %arg12[%c32, %c0_24] : memref<36x512xf32, #tpu.memory_space<vmem>>, vector<4x512xf32>
    tpu.vector_store %arg12[%c32, %c0_24], %66 {strides = array<i32>} : memref<36x512xf32, #tpu.memory_space<vmem>>, vector<4x512xf32>,
    %c0_25 = arith.constant 0 : index
    %c0_26 = arith.constant 0 : index
    %68 = vector.load %arg4[%c0_25, %c0_26] : memref<4x36xf32, #tpu.memory_space<vmem>>, vector<4x36xf32>
    %c0_27 = arith.constant 0 : index
    %c0_28 = arith.constant 0 : index
    %69 = vector.load %arg12[%c0_27, %c0_28] : memref<36x512xf32, #tpu.memory_space<vmem>>, vector<36x512xf32>
    %cst_29 = arith.constant dense<0.000000e+00> : vector<4x512xf32>
    %70 = tpu.matmul %68, %69, %cst_29 {dimension_numbers = #tpu.dot_dimension_numbers<[1], [0], [0], [1], [0, 0, 1, 1], [], []>} : vector<4x36xf32>, vector<36x512xf32>, vector<4x512xf32> -> vector<4x512xf32>
    %c0_30 = arith.constant 0 : index
    %c0_31 = arith.constant 0 : index
    %71 = vector.load %arg5[%c0_30, %c0_31] : memref<4x1xf32, #tpu.memory_space<vmem>>, vector<4x1xf32>
    %c0_32 = arith.constant 0 : index
    %c0_33 = arith.constant 0 : index
    %72 = vector.load %arg6[%c0_32, %c0_33] : memref<4x1xf32, #tpu.memory_space<vmem>>, vector<4x1xf32>
    %cst_34 = arith.constant dense<0.000000e+00> : vector<4xf32>
    %73 = vector.multi_reduction <add>, %70, %cst_34 [1] : vector<4x512xf32> to vector<4xf32>
    %74 = vector.shape_cast %73 : vector<4xf32> to vector<4x1xf32>
    %cst_35 = arith.constant 0.001953125 : f32
    %75 = vector.broadcast %cst_35 : f32 to vector<4x1xf32>
    %76 = arith.mulf %74, %75 : vector<4x1xf32>
    %77 = vector.broadcast %76 : vector<4x1xf32> to vector<4x512xf32>
    %78 = arith.subf %70, %77 : vector<4x512xf32>
    %79 = arith.mulf %78, %78 : vector<4x512xf32>
    %cst_36 = arith.constant dense<0.000000e+00> : vector<4xf32>
    %80 = vector.multi_reduction <add>, %79, %cst_36 [1] : vector<4x512xf32> to vector<4xf32>
    %81 = vector.shape_cast %80 : vector<4xf32> to vector<4x1xf32>
    %cst_37 = arith.constant 0.001953125 : f32
    %82 = vector.broadcast %cst_37 : f32 to vector<4x1xf32>
    %83 = arith.mulf %81, %82 : vector<4x1xf32>
    %cst_38 = arith.constant 9.99999974E-6 : f32
    %84 = vector.broadcast %cst_38 : f32 to vector<4x1xf32>
    %85 = arith.addf %83, %84 : vector<4x1xf32>
    %86 = math.rsqrt %85 : vector<4x1xf32>
    %87 = arith.mulf %71, %86 : vector<4x1xf32>
    %88 = vector.broadcast %87 : vector<4x1xf32> to vector<4x512xf32>
    %89 = arith.mulf %78, %88 : vector<4x512xf32>
    %90 = vector.broadcast %72 : vector<4x1xf32> to vector<4x512xf32>
    %91 = arith.addf %89, %90 : vector<4x512xf32>
    %cst_39 = arith.constant 0.000000e+00 : f32
    %92 = vector.broadcast %cst_39 : f32 to vector<4x512xf32>
    %93 = arith.maximumf %91, %92 : vector<4x512xf32>
    %c0_40 = arith.constant 0 : index
    %c0_41 = arith.constant 0 : index
    %94 = vector.load %arg7[%c0_40, %c0_41] : memref<16x4xf32, #tpu.memory_space<vmem>>, vector<16x4xf32>
    %cst_42 = arith.constant dense<0.000000e+00> : vector<16x512xf32>
    %95 = tpu.matmul %94, %93, %cst_42 {dimension_numbers = #tpu.dot_dimension_numbers<[1], [0], [0], [1], [0, 0, 1, 1], [], []>} : vector<16x4xf32>, vector<4x512xf32>, vector<16x512xf32> -> vector<16x512xf32>
    %c0_43 = arith.constant 0 : index
    %c0_44 = arith.constant 0 : index
    %96 = vector.load %arg8[%c0_43, %c0_44] : memref<16x1xf32, #tpu.memory_space<vmem>>, vector<16x1xf32>
    %c0_45 = arith.constant 0 : index
    %c0_46 = arith.constant 0 : index
    %97 = vector.load %arg9[%c0_45, %c0_46] : memref<16x1xf32, #tpu.memory_space<vmem>>, vector<16x1xf32>
    %cst_47 = arith.constant dense<0.000000e+00> : vector<16xf32>
    %98 = vector.multi_reduction <add>, %95, %cst_47 [1] : vector<16x512xf32> to vector<16xf32>
    %99 = vector.shape_cast %98 : vector<16xf32> to vector<16x1xf32>
    %cst_48 = arith.constant 0.001953125 : f32
    %100 = vector.broadcast %cst_48 : f32 to vector<16x1xf32>
    %101 = arith.mulf %99, %100 : vector<16x1xf32>
    %102 = vector.broadcast %101 : vector<16x1xf32> to vector<16x512xf32>
    %103 = arith.subf %95, %102 : vector<16x512xf32>
    %104 = arith.mulf %103, %103 : vector<16x512xf32>
    %cst_49 = arith.constant dense<0.000000e+00> : vector<16xf32>
    %105 = vector.multi_reduction <add>, %104, %cst_49 [1] : vector<16x512xf32> to vector<16xf32>
    %106 = vector.shape_cast %105 : vector<16xf32> to vector<16x1xf32>
    %cst_50 = arith.constant 0.001953125 : f32
    %107 = vector.broadcast %cst_50 : f32 to vector<16x1xf32>
    %108 = arith.mulf %106, %107 : vector<16x1xf32>
    %cst_51 = arith.constant 9.99999974E-6 : f32
    %109 = vector.broadcast %cst_51 : f32 to vector<16x1xf32>
    %110 = arith.addf %108, %109 : vector<16x1xf32>
    %111 = math.rsqrt %110 : vector<16x1xf32>
    %112 = arith.mulf %96, %111 : vector<16x1xf32>
    %113 = vector.broadcast %112 : vector<16x1xf32> to vector<16x512xf32>
    %114 = arith.mulf %103, %113 : vector<16x512xf32>
    %115 = vector.broadcast %97 : vector<16x1xf32> to vector<16x512xf32>
    %116 = arith.addf %114, %115 : vector<16x512xf32>
    %117 = arith.addf %116, %0 : vector<16x512xf32>
    %cst_52 = arith.constant 0.000000e+00 : f32
    %118 = vector.broadcast %cst_52 : f32 to vector<16x512xf32>
    %119 = arith.maximumf %117, %118 : vector<16x512xf32>
    %c0_53 = arith.constant 0 : index
    %c0_54 = arith.constant 0 : index
    %120 = vector.load %arg11[%c0_53, %c0_54] : memref<16x512xf32, #tpu.memory_space<vmem>>, vector<16x512xf32>
    tpu.vector_store %arg11[%c0_53, %c0_54], %119 {strides = array<i32>} : memref<16x512xf32, #tpu.memory_space<vmem>>, vector<16x512xf32>,
    return
  }
}

</mosaic_0001>

<llo_original>
// kernel: tpu_custom_call.1
$region0: #{tpu_custom_call.1}
  #allocation0 [shape = 'u32[]', space=smem, size = 0x4, offset = 0x4, fixed_abs, tag = 'smem constant byte address 0x4 - core index']
  #allocation1 [shape = 'u32[72,128]{1,0:T(1,128)}', space=vmem, size = 0x9000, scoped, tag = 'internal scratch']
  #allocation2 [shape = 'f32[36,512]{1,0:T(8,128)}', space=vmem, size = 0x14000, scoped, tag = 'scratch operand']
  %s0 = inlined_call_operand.vmem [shape: f32[16,512], index: 0, kind: input, shape index: {}]
  %s1 = inlined_call_operand.vmem [shape: f32[4,16], index: 1, kind: input, shape index: {}]
  %s2 = inlined_call_operand.vmem [shape: f32[4,1], index: 2, kind: input, shape index: {}]
  %s3 = inlined_call_operand.vmem [shape: f32[4,1], index: 3, kind: input, shape index: {}]
  %s4 = inlined_call_operand.vmem [shape: f32[4,36], index: 4, kind: input, shape index: {}]
  %s5 = inlined_call_operand.vmem [shape: f32[4,1], index: 5, kind: input, shape index: {}]
  %s6 = inlined_call_operand.vmem [shape: f32[4,1], index: 6, kind: input, shape index: {}]
  %s7 = inlined_call_operand.vmem [shape: f32[16,4], index: 7, kind: input, shape index: {}]
  %s8 = inlined_call_operand.vmem [shape: f32[16,1], index: 8, kind: input, shape index: {}]
  %s9 = inlined_call_operand.vmem [shape: f32[16,1], index: 9, kind: input, shape index: {}]
  %s10 = inlined_call_operand.hbm [shape: f32[9,512], index: 10, kind: input, shape index: {}]
  %s11 = inlined_call_operand.hbm [shape: f32[16,512], index: 11, kind: output, shape index: {}]
  %s12 = sld [smem:[#allocation0]]
  $region58: #{tpu_custom_call.1} parent=0
    _
  %s14 = ssub.s32 1, %s12
  %s15 = scalar_select 0, %s14, %s12
  $region1: #{tpu_custom_call.1} parent=0
    #allocation3 [shape = 'u8[32768]{0}', space=vmem, size = 0x8000, scoped, tag = 'input window, operand 10, single buffered']
    #allocation4 [shape = 's32[1]{0}', space=sflag, size = 0x4, scoped, tag = 'scoped memory for tpu_custom_call.1']
    #allocation5 [shape = 's32[1]{0}', space=sflag, size = 0x4, scoped, tag = 'scoped memory for tpu_custom_call.1']
    #allocation6 [shape = 'u8[32768]{0}', space=vmem, size = 0x8000, scoped, tag = 'output window, operand 0, single buffered']
    %16 = vsyncpa [#allocation4], 0
    %17 = vsyncpa [#allocation5], 0
    // Predicated region
    $region2: #{tpu_custom_call.1} parent=1 // pred_check
      _
    $region3: #{tpu_custom_call.1} parent=1 // pred_check_branch
      %19 = sbr.rel (0) target = $region5
    $region4: #{tpu_custom_call.1} parent=1 // pred_region
      _
    $region5: #{tpu_custom_call.1} parent=1 // pred_fallthru
      _
    // Predicated region
    $region6: #{tpu_custom_call.1} parent=1 // pred_check
      _
    $region7: #{tpu_custom_call.1} parent=1 // pred_check_branch
      %21 = sbr.rel (0) target = $region9
    $region8: #{tpu_custom_call.1} parent=1 // pred_region
      _
    $region9: #{tpu_custom_call.1} parent=1 // pred_fallthru
      _
    // Predicated region
    $region10: #{tpu_custom_call.1} parent=1 // pred_check
      _
    $region11: #{tpu_custom_call.1} parent=1 // pred_check_branch
      %23 = sbr.rel (0) target = $region13
    $region12: #{tpu_custom_call.1} parent=1 // pred_region
      _
    $region13: #{tpu_custom_call.1} parent=1 // pred_fallthru
      _
    // Predicated region
    $region14: #{tpu_custom_call.1} parent=1 // pred_check
      _
    $region15: #{tpu_custom_call.1} parent=1 // pred_check_branch
      %25 = sbr.rel (0) target = $region17
    $region16: #{tpu_custom_call.1} parent=1 // pred_region
      _
    $region17: #{tpu_custom_call.1} parent=1 // pred_fallthru
      _
    // Predicated region
    $region18: #{tpu_custom_call.1} parent=1 // pred_check
      _
    $region19: #{tpu_custom_call.1} parent=1 // pred_check_branch
      %27 = sbr.rel (0) target = $region21
    $region20: #{tpu_custom_call.1} parent=1 // pred_region
      _
    $region21: #{tpu_custom_call.1} parent=1 // pred_fallthru
      _
    // Predicated region
    $region22: #{tpu_custom_call.1} parent=1 // pred_check
      _
    $region23: #{tpu_custom_call.1} parent=1 // pred_check_branch
      %29 = sbr.rel (0) target = $region25
    $region24: #{tpu_custom_call.1} parent=1 // pred_region
      _
    $region25: #{tpu_custom_call.1} parent=1 // pred_fallthru
      _
    // Predicated region
    $region26: #{tpu_custom_call.1} parent=1 // pred_check
      _
    $region27: #{tpu_custom_call.1} parent=1 // pred_check_branch
      %31 = sbr.rel (0) target = $region29
    $region28: #{tpu_custom_call.1} parent=1 // pred_region
      _
    $region29: #{tpu_custom_call.1} parent=1 // pred_fallthru
      _
    // Predicated region
    $region30: #{tpu_custom_call.1} parent=1 // pred_check
      _
    $region31: #{tpu_custom_call.1} parent=1 // pred_check_branch
      %33 = sbr.rel (0) target = $region33
    $region32: #{tpu_custom_call.1} parent=1 // pred_region
      _
    $region33: #{tpu_custom_call.1} parent=1 // pred_fallthru
      _
    // Predicated region
    $region34: #{tpu_custom_call.1} parent=1 // pred_check
      _
    $region35: #{tpu_custom_call.1} parent=1 // pred_check_branch
      %35 = sbr.rel (0) target = $region37
    $region36: #{tpu_custom_call.1} parent=1 // pred_region
      _
    $region37: #{tpu_custom_call.1} parent=1 // pred_fallthru
      _
    // Predicated region
    $region38: #{tpu_custom_call.1} parent=1 // pred_check
      _
    $region39: #{tpu_custom_call.1} parent=1 // pred_check_branch
      %37 = sbr.rel (0) target = $region41
    $region40: #{tpu_custom_call.1} parent=1 // pred_region
      _
    $region41: #{tpu_custom_call.1} parent=1 // pred_fallthru
      _
    // Predicated region
    $region42: #{tpu_custom_call.1} parent=1 // pred_check
      _
    $region43: #{tpu_custom_call.1} parent=1 // pred_check_branch
      %39 = sbr.rel (0) target = $region45
    $region44: #{tpu_custom_call.1} parent=1 // pred_region
      %41 = vsyncadd [#allocation4], 0
      %s42 = sshll.u32 %s10, 4
      %s43 = int_to_ptr.hbm [resolvable:$true] %s42
      %s44 = sshll.u32 [#allocation3], 4
      %s45 = int_to_ptr.vmem [resolvable:$true] %s44
      %50 = dma.hbm_to_vmem [thread:$0]  %s43, 1024, %s45, [#allocation4], 512, 512, 32
    $region45: #{tpu_custom_call.1} parent=1 // pred_fallthru
      _
    // Predicated region
    $region46: #{tpu_custom_call.1} parent=1 // pred_check
      _
    $region47: #{tpu_custom_call.1} parent=1 // pred_check_branch
      %52 = sbr.rel (0) target = $region49
    $region48: #{tpu_custom_call.1} parent=1 // pred_region
      %54 = dma.done [#allocation4], 1024
    $region49: #{tpu_custom_call.1} parent=1 // pred_fallthru
      _
    %v55 = vld [vmem:[%s0] sm:$0xff]
    %v56 = vld [vmem:[%s0 + $0x8] sm:$0xff]
    %v57 = vld [vmem:[%s0 + $0x10] sm:$0xff]
    %v58 = vld [vmem:[%s0 + $0x18] sm:$0xff]
    %v59 = vld [vmem:[%s0 + $0x20] sm:$0xff]
    %v60 = vld [vmem:[%s0 + $0x28] sm:$0xff]
    %v61 = vld [vmem:[%s0 + $0x30] sm:$0xff]
    %v62 = vld [vmem:[%s0 + $0x38] sm:$0xff]
    %v63 = vld [vmem:[%s1] sm:$0xf]
    %vm64 = vcmask 130048
    %v66 = vsel %vm64, %v63, 0
    %68 = vmatpush.msra.mxu0 0.0
    %69 = vmatpush.msra.mxu0 0.0
    %70 = vmatpush.msra.mxu0 0.0
    %71 = vmatpush.msra.mxu0 0.0
    %72 = vmatpush.msra.mxu0 0.0
    %73 = vmatpush.msra.mxu0 0.0
    %74 = vmatpush.msra.mxu0 0.0
    %75 = vmatpush.msra.mxu0 0.0
    %76 = vmatpush.msra.mxu0 0.0
    %77 = vmatpush.msra.mxu0 0.0
    %78 = vmatpush.msra.mxu0 0.0
    %79 = vmatpush.msra.mxu0 0.0
    %80 = vmatpush.msra.mxu0 0.0
    %81 = vmatpush.msra.mxu0 0.0
    %82 = vmatpush.msra.mxu0 %v59
    %83 = vmatpush.msra.mxu0 %v55
    %84 = vmatmul.f32.gmra.mxu0 %v66
    %v85 = vpop.f32.mrf.mxu0
    %v86 = vadd.f32 0.0, %v85
    %87 = vdwg.mxu0
    %88 = vmatpush.msra.mxu0 0.0
    %89 = vmatpush.msra.mxu0 0.0
    %90 = vmatpush.msra.mxu0 0.0
    %91 = vmatpush.msra.mxu0 0.0
    %92 = vmatpush.msra.mxu0 0.0
    %93 = vmatpush.msra.mxu0 0.0
    %94 = vmatpush.msra.mxu0 0.0
    %95 = vmatpush.msra.mxu0 0.0
    %96 = vmatpush.msra.mxu0 0.0
    %97 = vmatpush.msra.mxu0 0.0
    %98 = vmatpush.msra.mxu0 0.0
    %99 = vmatpush.msra.mxu0 0.0
    %100 = vmatpush.msra.mxu0 0.0
    %101 = vmatpush.msra.mxu0 0.0
    %102 = vmatpush.msra.mxu0 %v60
    %103 = vmatpush.msra.mxu0 %v56
    %104 = vmatmul.f32.gmra.mxu0 %v66
    %v105 = vpop.f32.mrf.mxu0
    %v106 = vadd.f32 0.0, %v105
    %107 = vdwg.mxu0
    %108 = vmatpush.msra.mxu0 0.0
    %109 = vmatpush.msra.mxu0 0.0
    %110 = vmatpush.msra.mxu0 0.0
    %111 = vmatpush.msra.mxu0 0.0
    %112 = vmatpush.msra.mxu0 0.0
    %113 = vmatpush.msra.mxu0 0.0
    %114 = vmatpush.msra.mxu0 0.0
    %115 = vmatpush.msra.mxu0 0.0
    %116 = vmatpush.msra.mxu0 0.0
    %117 = vmatpush.msra.mxu0 0.0
    %118 = vmatpush.msra.mxu0 0.0
    %119 = vmatpush.msra.mxu0 0.0
    %120 = vmatpush.msra.mxu0 0.0
    %121 = vmatpush.msra.mxu0 0.0
    %122 = vmatpush.msra.mxu0 %v61
    %123 = vmatpush.msra.mxu0 %v57
    %124 = vmatmul.f32.gmra.mxu0 %v66
    %v125 = vpop.f32.mrf.mxu0
    %v126 = vadd.f32 0.0, %v125
    %127 = vdwg.mxu0
    %128 = vmatpush.msra.mxu0 0.0
    %129 = vmatpush.msra.mxu0 0.0
    %130 = vmatpush.msra.mxu0 0.0
    %131 = vmatpush.msra.mxu0 0.0
    %132 = vmatpush.msra.mxu0 0.0
    %133 = vmatpush.msra.mxu0 0.0
    %134 = vmatpush.msra.mxu0 0.0
    %135 = vmatpush.msra.mxu0 0.0
    %136 = vmatpush.msra.mxu0 0.0
    %137 = vmatpush.msra.mxu0 0.0
    %138 = vmatpush.msra.mxu0 0.0
    %139 = vmatpush.msra.mxu0 0.0
    %140 = vmatpush.msra.mxu0 0.0
    %141 = vmatpush.msra.mxu0 0.0
    %142 = vmatpush.msra.mxu0 %v62
    %143 = vmatpush.msra.mxu0 %v58
    %144 = vmatmul.f32.gmra.mxu0 %v66
    %v145 = vpop.f32.mrf.mxu0
    %v146 = vadd.f32 0.0, %v145
    %147 = vdwg.mxu0
    %v148 = vld [vmem:[%s2] sm:$0xf]
    %v149 = vld [vmem:[%s3] sm:$0xf]
    %vm150 = vcmask 1043456
    %v151 = vsel %vm150, %v86, 0.0
    %v152 = vsel %vm150, %v106, 0.0
    %v153 = vadd.f32 %v151, %v152
    %v154 = vsel %vm150, %v126, 0.0
    %v155 = vadd.f32 %v153, %v154
    %v156 = vsel %vm150, %v146, 0.0
    %v157 = vadd.f32 %v155, %v156
    %158 = vadd.xlane.f32.xlu0 %v157
    %v159 = vpop.xlane.xlu0 %158
    %v160 = vmul.f32 %v159, 0.001953125
    %v161 = vsub.f32 %v86, %v160
    %v162 = vsub.f32 %v106, %v160
    %v163 = vsub.f32 %v126, %v160
    %v164 = vsub.f32 %v146, %v160
    %v165 = vmul.f32 %v161, %v161
    %v166 = vmul.f32 %v162, %v162
    %v167 = vmul.f32 %v163, %v163
    %v168 = vmul.f32 %v164, %v164
    %v169 = vsel %vm150, %v165, 0.0
    %v170 = vsel %vm150, %v166, 0.0
    %v171 = vadd.f32 %v169, %v170
    %v172 = vsel %vm150, %v167, 0.0
    %v173 = vadd.f32 %v171, %v172
    %v174 = vsel %vm150, %v168, 0.0
    %v175 = vadd.f32 %v173, %v174
    %176 = vadd.xlane.f32.xlu0 %v175
    %v177 = vpop.xlane.xlu0 %176
    %v178 = vmul.f32 %v177, 0.001953125
    %v179 = vadd.f32 %v178, 1e-05
    %v180 = vrsqrt.pop %v179
    %v181 = vmul.f32 %v180, %v179
    %v182 = vmul.f32 %v181, %v180
    %v183 = vmul.f32 0.5, %v182
    %v184 = vsub.f32 1.5, %v183
    %v185 = vmul.f32 %v180, %v184
    %vm186 = vweird.f32 %v179
    %vm187 = vweird.f32 %v180
    %vm188 = vmor %vm186, %vm187
    %v189 = vsel %vm188, %v180, %v185
    %v190 = vmul.f32 %v148, %v189
    %192 = vset.pattern.permute.xlu0 0
    %193 = vperm.xlu0 %192, %v190
    %v194 = vpop.permute.xlu0 %193
    %v196 = vmul.f32 %v161, %v194
    %v197 = vmul.f32 %v162, %v194
    %v198 = vmul.f32 %v163, %v194
    %v199 = vmul.f32 %v164, %v194
    %201 = vset.pattern.permute.xlu0 0
    %202 = vperm.xlu0 %201, %v149
    %v203 = vpop.permute.xlu0 %202
    %v205 = vadd.f32 %v196, %v203
    %v206 = vadd.f32 %v197, %v203
    %v207 = vadd.f32 %v198, %v203
    %v208 = vadd.f32 %v199, %v203
    %v209 = vmax.f32 %v205, 0.0
    %v210 = vmax.f32 %v206, 0.0
    %v211 = vmax.f32 %v207, 0.0
    %v212 = vmax.f32 %v208, 0.0
    %v213 = vld [vmem:[#allocation3] sm:$0xff]
    %v214 = vld [vmem:[#allocation3 + $0x8] sm:$0xff]
    %v215 = vld [vmem:[#allocation3 + $0x10] sm:$0xff]
    %v216 = vld [vmem:[#allocation3 + $0x18] sm:$0xff]
    %v217 = vld [vmem:[#allocation3 + $0x20] sm:$0x1]
    %v218 = vld [vmem:[#allocation3 + $0x28] sm:$0x1]
    %v219 = vld [vmem:[#allocation3 + $0x30] sm:$0x1]
    %v220 = vld [vmem:[#allocation3 + $0x38] sm:$0x1]
    %221 = vrot.lane.b32.xlu0 %v209, 34
    %v222 = vpop.permute.xlu0 %221
    %223 = vrot.lane.b32.xlu0 %v210, 34
    %v224 = vpop.permute.xlu0 %223
    %225 = vrot.lane.b32.xlu0 %v211, 34
    %v226 = vpop.permute.xlu0 %225
    %227 = vrot.lane.b32.xlu0 %v212, 34
    %v228 = vpop.permute.xlu0 %227
    %v229 = vlaneseq
    %v230 = vand.u32 %v229, 127
    %vm231 = vcmp.lt.s32.totalorder %v230, 34
    %v232 = vsel %vm231, %v226, %v228
    %v233 = vsel %vm231, %v224, %v226
    %v234 = vsel %vm231, %v222, %v224
    %v235 = vsel %vm231, %v228, %v222
    %v236 = vperm.slane %v213, 0
    %v237 = vperm.slane %v214, 0
    %v238 = vperm.slane %v215, 0
    %v239 = vperm.slane %v216, 0
    %v240 = vmul.f32 %v235, %v236
    %v241 = vmul.f32 %v234, %v237
    %v242 = vmul.f32 %v233, %v238
    %v243 = vmul.f32 %v232, %v239
    %244 = vst [vmem:[#allocation2] sm:$0xf] %v240
    %245 = vst [vmem:[#allocation2 + $0x8] sm:$0xf] %v241
    %246 = vst [vmem:[#allocation2 + $0x10] sm:$0xf] %v242
    %247 = vst [vmem:[#allocation2 + $0x18] sm:$0xf] %v243
    %248 = vrot.lane.b32.xlu0 %v209, 32
    %v249 = vpop.permute.xlu0 %248
    %250 = vrot.lane.b32.xlu0 %v210, 32
    %v251 = vpop.permute.xlu0 %250
    %252 = vrot.lane.b32.xlu0 %v211, 32
    %v253 = vpop.permute.xlu0 %252
    %254 = vrot.lane.b32.xlu0 %v212, 32
    %v255 = vpop.permute.xlu0 %254
    %vm256 = vcmp.lt.s32.totalorder %v230, 32
    %v257 = vsel %vm256, %v253, %v255
    %v258 = vsel %vm256, %v251, %v253
    %v259 = vsel %vm256, %v249, %v251
    %v260 = vsel %vm256, %v255, %v249
    %v261 = vperm.slane %v213, 1
    %v262 = vperm.slane %v214, 1
    %v263 = vperm.slane %v215, 1
    %v264 = vperm.slane %v216, 1
    %v265 = vmul.f32 %v260, %v261
    %v266 = vmul.f32 %v259, %v262
    %v267 = vmul.f32 %v258, %v263
    %v268 = vmul.f32 %v257, %v264
    %v273 = vrot.slane %v265, 4
    %v274 = vrot.slane %v266, 4
    %v275 = vrot.slane %v267, 4
    %v276 = vrot.slane %v268, 4
    %281 = vst [vmem:[#allocation2] sm:$0xf0] %v273
    %282 = vst [vmem:[#allocation2 + $0x8] sm:$0xf0] %v274
    %283 = vst [vmem:[#allocation2 + $0x10] sm:$0xf0] %v275
    %284 = vst [vmem:[#allocation2 + $0x18] sm:$0xf0] %v276
    %285 = vrot.lane.b32.xlu0 %v209, 30
    %v286 = vpop.permute.xlu0 %285
    %287 = vrot.lane.b32.xlu0 %v210, 30
    %v288 = vpop.permute.xlu0 %287
    %289 = vrot.lane.b32.xlu0 %v211, 30
    %v290 = vpop.permute.xlu0 %289
    %291 = vrot.lane.b32.xlu0 %v212, 30
    %v292 = vpop.permute.xlu0 %291
    %vm293 = vcmp.lt.s32.totalorder %v230, 30
    %v294 = vsel %vm293, %v290, %v292
    %v295 = vsel %vm293, %v288, %v290
    %v296 = vsel %vm293, %v286, %v288
    %v297 = vsel %vm293, %v292, %v286
    %v298 = vperm.slane %v213, 2
    %v299 = vperm.slane %v214, 2
    %v300 = vperm.slane %v215, 2
    %v301 = vperm.slane %v216, 2
    %v302 = vmul.f32 %v297, %v298
    %v303 = vmul.f32 %v296, %v299
    %v304 = vmul.f32 %v295, %v300
    %v305 = vmul.f32 %v294, %v301
    %306 = vst [vmem:[#allocation2 + $0x20] sm:$0xf] %v302
    %307 = vst [vmem:[#allocation2 + $0x28] sm:$0xf] %v303
    %308 = vst [vmem:[#allocation2 + $0x30] sm:$0xf] %v304
    %309 = vst [vmem:[#allocation2 + $0x38] sm:$0xf] %v305
    %310 = vrot.lane.b32.xlu0 %v209, 2
    %v311 = vpop.permute.xlu0 %310
    %312 = vrot.lane.b32.xlu0 %v210, 2
    %v313 = vpop.permute.xlu0 %312
    %314 = vrot.lane.b32.xlu0 %v211, 2
    %v315 = vpop.permute.xlu0 %314
    %316 = vrot.lane.b32.xlu0 %v212, 2
    %v317 = vpop.permute.xlu0 %316
    %vm318 = vcmp.lt.s32.totalorder %v230, 2
    %v319 = vsel %vm318, %v315, %v317
    %v320 = vsel %vm318, %v313, %v315
    %v321 = vsel %vm318, %v311, %v313
    %v322 = vsel %vm318, %v317, %v311
    %v323 = vperm.slane %v213, 3
    %v324 = vperm.slane %v214, 3
    %v325 = vperm.slane %v215, 3
    %v326 = vperm.slane %v216, 3
    %v327 = vmul.f32 %v322, %v323
    %v328 = vmul.f32 %v321, %v324
    %v329 = vmul.f32 %v320, %v325
    %v330 = vmul.f32 %v319, %v326
    %v335 = vrot.slane %v327, 4
    %v336 = vrot.slane %v328, 4
    %v337 = vrot.slane %v329, 4
    %v338 = vrot.slane %v330, 4
    %343 = vst [vmem:[#allocation2 + $0x20] sm:$0xf0] %v335
    %344 = vst [vmem:[#allocation2 + $0x28] sm:$0xf0] %v336
    %345 = vst [vmem:[#allocation2 + $0x30] sm:$0xf0] %v337
    %346 = vst [vmem:[#allocation2 + $0x38] sm:$0xf0] %v338
    %347 = vst [vmem:[#allocation2 + $0x40] sm:$0xf] %v209
    %348 = vst [vmem:[#allocation2 + $0x48] sm:$0xf] %v210
    %349 = vst [vmem:[#allocation2 + $0x50] sm:$0xf] %v211
    %350 = vst [vmem:[#allocation2 + $0x58] sm:$0xf] %v212
    %351 = vrot.lane.b32.xlu0 %v209, 126
    %v352 = vpop.permute.xlu0 %351
    %353 = vrot.lane.b32.xlu0 %v210, 126
    %v354 = vpop.permute.xlu0 %353
    %355 = vrot.lane.b32.xlu0 %v211, 126
    %v356 = vpop.permute.xlu0 %355
    %357 = vrot.lane.b32.xlu0 %v212, 126
    %v358 = vpop.permute.xlu0 %357
    %vm359 = vcmp.lt.s32.totalorder %v230, 126
    %v360 = vsel %vm359, %v356, %v358
    %v361 = vsel %vm359, %v354, %v356
    %v362 = vsel %vm359, %v352, %v354
    %v363 = vsel %vm359, %v358, %v352
    %v364 = vperm.slane %v213, 5
    %v365 = vperm.slane %v214, 5
    %v366 = vperm.slane %v215, 5
    %v367 = vperm.slane %v216, 5
    %v368 = vmul.f32 %v362, %v364
    %v369 = vmul.f32 %v361, %v365
    %v370 = vmul.f32 %v360, %v366
    %v371 = vmul.f32 %v363, %v367
    %v376 = vrot.slane %v368, 4
    %v377 = vrot.slane %v369, 4
    %v378 = vrot.slane %v370, 4
    %v379 = vrot.slane %v371, 4
    %384 = vst [vmem:[#allocation2 + $0x40] sm:$0xf0] %v376
    %385 = vst [vmem:[#allocation2 + $0x48] sm:$0xf0] %v377
    %386 = vst [vmem:[#allocation2 + $0x50] sm:$0xf0] %v378
    %387 = vst [vmem:[#allocation2 + $0x58] sm:$0xf0] %v379
    %388 = vrot.lane.b32.xlu0 %v209, 98
    %v389 = vpop.permute.xlu0 %388
    %390 = vrot.lane.b32.xlu0 %v210, 98
    %v391 = vpop.permute.xlu0 %390
    %392 = vrot.lane.b32.xlu0 %v211, 98
    %v393 = vpop.permute.xlu0 %392
    %394 = vrot.lane.b32.xlu0 %v212, 98
    %v395 = vpop.permute.xlu0 %394
    %vm396 = vcmp.lt.s32.totalorder %v230, 98
    %v397 = vsel %vm396, %v393, %v395
    %v398 = vsel %vm396, %v391, %v393
    %v399 = vsel %vm396, %v389, %v391
    %v400 = vsel %vm396, %v395, %v389
    %v401 = vperm.slane %v213, 6
    %v402 = vperm.slane %v214, 6
    %v403 = vperm.slane %v215, 6
    %v404 = vperm.slane %v216, 6
    %v405 = vmul.f32 %v399, %v401
    %v406 = vmul.f32 %v398, %v402
    %v407 = vmul.f32 %v397, %v403
    %v408 = vmul.f32 %v400, %v404
    %409 = vst [vmem:[#allocation2 + $0x60] sm:$0xf] %v405
    %410 = vst [vmem:[#allocation2 + $0x68] sm:$0xf] %v406
    %411 = vst [vmem:[#allocation2 + $0x70] sm:$0xf] %v407
    %412 = vst [vmem:[#allocation2 + $0x78] sm:$0xf] %v408
    %413 = vrot.lane.b32.xlu0 %v209, 96
    %v414 = vpop.permute.xlu0 %413
    %415 = vrot.lane.b32.xlu0 %v210, 96
    %v416 = vpop.permute.xlu0 %415
    %417 = vrot.lane.b32.xlu0 %v211, 96
    %v418 = vpop.permute.xlu0 %417
    %419 = vrot.lane.b32.xlu0 %v212, 96
    %v420 = vpop.permute.xlu0 %419
    %vm421 = vcmp.lt.s32.totalorder %v230, 96
    %v422 = vsel %vm421, %v418, %v420
    %v423 = vsel %vm421, %v416, %v418
    %v424 = vsel %vm421, %v414, %v416
    %v425 = vsel %vm421, %v420, %v414
    %v426 = vperm.slane %v213, 7
    %v427 = vperm.slane %v214, 7
    %v428 = vperm.slane %v215, 7
    %v429 = vperm.slane %v216, 7
    %v430 = vmul.f32 %v424, %v426
    %v431 = vmul.f32 %v423, %v427
    %v432 = vmul.f32 %v422, %v428
    %v433 = vmul.f32 %v425, %v429
    %v438 = vrot.slane %v430, 4
    %v439 = vrot.slane %v431, 4
    %v440 = vrot.slane %v432, 4
    %v441 = vrot.slane %v433, 4
    %446 = vst [vmem:[#allocation2 + $0x60] sm:$0xf0] %v438
    %447 = vst [vmem:[#allocation2 + $0x68] sm:$0xf0] %v439
    %448 = vst [vmem:[#allocation2 + $0x70] sm:$0xf0] %v440
    %449 = vst [vmem:[#allocation2 + $0x78] sm:$0xf0] %v441
    %450 = vrot.lane.b32.xlu0 %v209, 94
    %v451 = vpop.permute.xlu0 %450
    %452 = vrot.lane.b32.xlu0 %v210, 94
    %v453 = vpop.permute.xlu0 %452
    %454 = vrot.lane.b32.xlu0 %v211, 94
    %v455 = vpop.permute.xlu0 %454
    %456 = vrot.lane.b32.xlu0 %v212, 94
    %v457 = vpop.permute.xlu0 %456
    %vm458 = vcmp.lt.s32.totalorder %v230, 94
    %v459 = vsel %vm458, %v455, %v457
    %v460 = vsel %vm458, %v453, %v455
    %v461 = vsel %vm458, %v451, %v453
    %v462 = vsel %vm458, %v457, %v451
    %v463 = vperm.slane %v217, 0
    %v464 = vperm.slane %v218, 0
    %v465 = vperm.slane %v219, 0
    %v466 = vperm.slane %v220, 0
    %v467 = vmul.f32 %v461, %v463
    %v468 = vmul.f32 %v460, %v464
    %v469 = vmul.f32 %v459, %v465
    %v470 = vmul.f32 %v462, %v466
    %471 = vst [vmem:[#allocation2 + $0x80] sm:$0xf] %v467
    %472 = vst [vmem:[#allocation2 + $0x88] sm:$0xf] %v468
    %473 = vst [vmem:[#allocation2 + $0x90] sm:$0xf] %v469
    %474 = vst [vmem:[#allocation2 + $0x98] sm:$0xf] %v470
    %v475 = vld [vmem:[%s4] sm:$0xf]
    %v476 = vld [vmem:[#allocation2] sm:$0xff]
    %v477 = vld [vmem:[#allocation2 + $0x8] sm:$0xff]
    %v478 = vld [vmem:[#allocation2 + $0x10] sm:$0xff]
    %v479 = vld [vmem:[#allocation2 + $0x18] sm:$0xff]
    %v480 = vld [vmem:[#allocation2 + $0x20] sm:$0xff]
    %v481 = vld [vmem:[#allocation2 + $0x28] sm:$0xff]
    %v482 = vld [vmem:[#allocation2 + $0x30] sm:$0xff]
    %v483 = vld [vmem:[#allocation2 + $0x38] sm:$0xff]
    %v484 = vld [vmem:[#allocation2 + $0x40] sm:$0xff]
    %v485 = vld [vmem:[#allocation2 + $0x48] sm:$0xff]
    %v486 = vld [vmem:[#allocation2 + $0x50] sm:$0xff]
    %v487 = vld [vmem:[#allocation2 + $0x58] sm:$0xff]
    %v488 = vld [vmem:[#allocation2 + $0x60] sm:$0xff]
    %v489 = vld [vmem:[#allocation2 + $0x68] sm:$0xff]
    %v490 = vld [vmem:[#allocation2 + $0x70] sm:$0xff]
    %v491 = vld [vmem:[#allocation2 + $0x78] sm:$0xff]
    %v492 = vld [vmem:[#allocation2 + $0x80] sm:$0xf]
    %v493 = vld [vmem:[#allocation2 + $0x88] sm:$0xf]
    %v494 = vld [vmem:[#allocation2 + $0x90] sm:$0xf]
    %v495 = vld [vmem:[#allocation2 + $0x98] sm:$0xf]
    %vm496 = vcmask 293888
    %v498 = vsel %vm496, %v475, 0
    %v501 = vsel %vm150, %v492, 0
    %v504 = vsel %vm150, %v493, 0
    %v507 = vsel %vm150, %v494, 0
    %v510 = vsel %vm150, %v495, 0
    %512 = vmatpush.msra.mxu0 0.0
    %513 = vmatpush.msra.mxu0 0.0
    %514 = vmatpush.msra.mxu0 0.0
    %515 = vmatpush.msra.mxu0 0.0
    %516 = vmatpush.msra.mxu0 0.0
    %517 = vmatpush.msra.mxu0 0.0
    %518 = vmatpush.msra.mxu0 0.0
    %519 = vmatpush.msra.mxu0 0.0
    %520 = vmatpush.msra.mxu0 0.0
    %521 = vmatpush.msra.mxu0 0.0
    %522 = vmatpush.msra.mxu0 0.0
    %523 = vmatpush.msra.mxu0 %v501
    %524 = vmatpush.msra.mxu0 %v488
    %525 = vmatpush.msra.mxu0 %v484
    %526 = vmatpush.msra.mxu0 %v480
    %527 = vmatpush.msra.mxu0 %v476
    %528 = vmatmul.f32.gmra.mxu0 %v498
    %v529 = vpop.f32.mrf.mxu0
    %v530 = vadd.f32 0.0, %v529
    %531 = vdwg.mxu0
    %532 = vmatpush.msra.mxu0 0.0
    %533 = vmatpush.msra.mxu0 0.0
    %534 = vmatpush.msra.mxu0 0.0
    %535 = vmatpush.msra.mxu0 0.0
    %536 = vmatpush.msra.mxu0 0.0
    %537 = vmatpush.msra.mxu0 0.0
    %538 = vmatpush.msra.mxu0 0.0
    %539 = vmatpush.msra.mxu0 0.0
    %540 = vmatpush.msra.mxu0 0.0
    %541 = vmatpush.msra.mxu0 0.0
    %542 = vmatpush.msra.mxu0 0.0
    %543 = vmatpush.msra.mxu0 %v504
    %544 = vmatpush.msra.mxu0 %v489
    %545 = vmatpush.msra.mxu0 %v485
    %546 = vmatpush.msra.mxu0 %v481
    %547 = vmatpush.msra.mxu0 %v477
    %548 = vmatmul.f32.gmra.mxu0 %v498
    %v549 = vpop.f32.mrf.mxu0
    %v550 = vadd.f32 0.0, %v549
    %551 = vdwg.mxu0
    %552 = vmatpush.msra.mxu0 0.0
    %553 = vmatpush.msra.mxu0 0.0
    %554 = vmatpush.msra.mxu0 0.0
    %555 = vmatpush.msra.mxu0 0.0
    %556 = vmatpush.msra.mxu0 0.0
    %557 = vmatpush.msra.mxu0 0.0
    %558 = vmatpush.msra.mxu0 0.0
    %559 = vmatpush.msra.mxu0 0.0
    %560 = vmatpush.msra.mxu0 0.0
    %561 = vmatpush.msra.mxu0 0.0
    %562 = vmatpush.msra.mxu0 0.0
    %563 = vmatpush.msra.mxu0 %v507
    %564 = vmatpush.msra.mxu0 %v490
    %565 = vmatpush.msra.mxu0 %v486
    %566 = vmatpush.msra.mxu0 %v482
    %567 = vmatpush.msra.mxu0 %v478
    %568 = vmatmul.f32.gmra.mxu0 %v498
    %v569 = vpop.f32.mrf.mxu0
    %v570 = vadd.f32 0.0, %v569
    %571 = vdwg.mxu0
    %572 = vmatpush.msra.mxu0 0.0
    %573 = vmatpush.msra.mxu0 0.0
    %574 = vmatpush.msra.mxu0 0.0
    %575 = vmatpush.msra.mxu0 0.0
    %576 = vmatpush.msra.mxu0 0.0
    %577 = vmatpush.msra.mxu0 0.0
    %578 = vmatpush.msra.mxu0 0.0
    %579 = vmatpush.msra.mxu0 0.0
    %580 = vmatpush.msra.mxu0 0.0
    %581 = vmatpush.msra.mxu0 0.0
    %582 = vmatpush.msra.mxu0 0.0
    %583 = vmatpush.msra.mxu0 %v510
    %584 = vmatpush.msra.mxu0 %v491
    %585 = vmatpush.msra.mxu0 %v487
    %586 = vmatpush.msra.mxu0 %v483
    %587 = vmatpush.msra.mxu0 %v479
    %588 = vmatmul.f32.gmra.mxu0 %v498
    %v589 = vpop.f32.mrf.mxu0
    %v590 = vadd.f32 0.0, %v589
    %591 = vdwg.mxu0
    %v592 = vld [vmem:[%s5] sm:$0xf]
    %v593 = vld [vmem:[%s6] sm:$0xf]
    %v594 = vsel %vm150, %v530, 0.0
    %v595 = vsel %vm150, %v550, 0.0
    %v596 = vadd.f32 %v594, %v595
    %v597 = vsel %vm150, %v570, 0.0
    %v598 = vadd.f32 %v596, %v597
    %v599 = vsel %vm150, %v590, 0.0
    %v600 = vadd.f32 %v598, %v599
    %601 = vadd.xlane.f32.xlu0 %v600
    %v602 = vpop.xlane.xlu0 %601
    %v603 = vmul.f32 %v602, 0.001953125
    %v604 = vsub.f32 %v530, %v603
    %v605 = vsub.f32 %v550, %v603
    %v606 = vsub.f32 %v570, %v603
    %v607 = vsub.f32 %v590, %v603
    %v608 = vmul.f32 %v604, %v604
    %v609 = vmul.f32 %v605, %v605
    %v610 = vmul.f32 %v606, %v606
    %v611 = vmul.f32 %v607, %v607
    %v612 = vsel %vm150, %v608, 0.0
    %v613 = vsel %vm150, %v609, 0.0
    %v614 = vadd.f32 %v612, %v613
    %v615 = vsel %vm150, %v610, 0.0
    %v616 = vadd.f32 %v614, %v615
    %v617 = vsel %vm150, %v611, 0.0
    %v618 = vadd.f32 %v616, %v617
    %619 = vadd.xlane.f32.xlu0 %v618
    %v620 = vpop.xlane.xlu0 %619
    %v621 = vmul.f32 %v620, 0.001953125
    %v622 = vadd.f32 %v621, 1e-05
    %v623 = vrsqrt.pop %v622
    %v624 = vmul.f32 %v623, %v622
    %v625 = vmul.f32 %v624, %v623
    %v626 = vmul.f32 0.5, %v625
    %v627 = vsub.f32 1.5, %v626
    %v628 = vmul.f32 %v623, %v627
    %vm629 = vweird.f32 %v622
    %vm630 = vweird.f32 %v623
    %vm631 = vmor %vm629, %vm630
    %v632 = vsel %vm631, %v623, %v628
    %v633 = vmul.f32 %v592, %v632
    %635 = vset.pattern.permute.xlu0 0
    %636 = vperm.xlu0 %635, %v633
    %v637 = vpop.permute.xlu0 %636
    %v639 = vmul.f32 %v604, %v637
    %v640 = vmul.f32 %v605, %v637
    %v641 = vmul.f32 %v606, %v637
    %v642 = vmul.f32 %v607, %v637
    %644 = vset.pattern.permute.xlu0 0
    %645 = vperm.xlu0 %644, %v593
    %v646 = vpop.permute.xlu0 %645
    %v648 = vadd.f32 %v639, %v646
    %v649 = vadd.f32 %v640, %v646
    %v650 = vadd.f32 %v641, %v646
    %v651 = vadd.f32 %v642, %v646
    %v652 = vmax.f32 %v648, 0.0
    %v653 = vmax.f32 %v649, 0.0
    %v654 = vmax.f32 %v650, 0.0
    %v655 = vmax.f32 %v651, 0.0
    %v656 = vld [vmem:[%s7] sm:$0xff]
    %v657 = vld [vmem:[%s7 + $0x8] sm:$0xff]
    %vm658 = vcmask 31744
    %v660 = vsel %vm658, %v656, 0
    %v663 = vsel %vm658, %v657, 0
    %v666 = vsel %vm150, %v652, 0
    %v669 = vsel %vm150, %v653, 0
    %v672 = vsel %vm150, %v654, 0
    %v675 = vsel %vm150, %v655, 0
    %677 = vmatpush.msra.mxu0 0.0
    %678 = vmatpush.msra.mxu0 0.0
    %679 = vmatpush.msra.mxu0 0.0
    %680 = vmatpush.msra.mxu0 0.0
    %681 = vmatpush.msra.mxu0 0.0
    %682 = vmatpush.msra.mxu0 0.0
    %683 = vmatpush.msra.mxu0 0.0
    %684 = vmatpush.msra.mxu0 0.0
    %685 = vmatpush.msra.mxu0 0.0
    %686 = vmatpush.msra.mxu0 0.0
    %687 = vmatpush.msra.mxu0 0.0
    %688 = vmatpush.msra.mxu0 0.0
    %689 = vmatpush.msra.mxu0 0.0
    %690 = vmatpush.msra.mxu0 0.0
    %691 = vmatpush.msra.mxu0 0.0
    %692 = vmatpush.msra.mxu0 %v666
    %693 = vmatmul.f32.gmra.mxu0 %v660
    %v694 = vpop.f32.mrf.mxu0
    %v695 = vadd.f32 0.0, %v694
    %696 = vmatmul.f32.gmra.mxu0 %v663
    %v697 = vpop.f32.mrf.mxu0
    %v698 = vadd.f32 0.0, %v697
    %699 = vdwg.mxu0
    %700 = vmatpush.msra.mxu0 0.0
    %701 = vmatpush.msra.mxu0 0.0
    %702 = vmatpush.msra.mxu0 0.0
    %703 = vmatpush.msra.mxu0 0.0
    %704 = vmatpush.msra.mxu0 0.0
    %705 = vmatpush.msra.mxu0 0.0
    %706 = vmatpush.msra.mxu0 0.0
    %707 = vmatpush.msra.mxu0 0.0
    %708 = vmatpush.msra.mxu0 0.0
    %709 = vmatpush.msra.mxu0 0.0
    %710 = vmatpush.msra.mxu0 0.0
    %711 = vmatpush.msra.mxu0 0.0
    %712 = vmatpush.msra.mxu0 0.0
    %713 = vmatpush.msra.mxu0 0.0
    %714 = vmatpush.msra.mxu0 0.0
    %715 = vmatpush.msra.mxu0 %v669
    %716 = vmatmul.f32.gmra.mxu0 %v660
    %v717 = vpop.f32.mrf.mxu0
    %v718 = vadd.f32 0.0, %v717
    %719 = vmatmul.f32.gmra.mxu0 %v663
    %v720 = vpop.f32.mrf.mxu0
    %v721 = vadd.f32 0.0, %v720
    %722 = vdwg.mxu0
    %723 = vmatpush.msra.mxu0 0.0
    %724 = vmatpush.msra.mxu0 0.0
    %725 = vmatpush.msra.mxu0 0.0
    %726 = vmatpush.msra.mxu0 0.0
    %727 = vmatpush.msra.mxu0 0.0
    %728 = vmatpush.msra.mxu0 0.0
    %729 = vmatpush.msra.mxu0 0.0
    %730 = vmatpush.msra.mxu0 0.0
    %731 = vmatpush.msra.mxu0 0.0
    %732 = vmatpush.msra.mxu0 0.0
    %733 = vmatpush.msra.mxu0 0.0
    %734 = vmatpush.msra.mxu0 0.0
    %735 = vmatpush.msra.mxu0 0.0
    %736 = vmatpush.msra.mxu0 0.0
    %737 = vmatpush.msra.mxu0 0.0
    %738 = vmatpush.msra.mxu0 %v672
    %739 = vmatmul.f32.gmra.mxu0 %v660
    %v740 = vpop.f32.mrf.mxu0
    %v741 = vadd.f32 0.0, %v740
    %742 = vmatmul.f32.gmra.mxu0 %v663
    %v743 = vpop.f32.mrf.mxu0
    %v744 = vadd.f32 0.0, %v743
    %745 = vdwg.mxu0
    %746 = vmatpush.msra.mxu0 0.0
    %747 = vmatpush.msra.mxu0 0.0
    %748 = vmatpush.msra.mxu0 0.0
    %749 = vmatpush.msra.mxu0 0.0
    %750 = vmatpush.msra.mxu0 0.0
    %751 = vmatpush.msra.mxu0 0.0
    %752 = vmatpush.msra.mxu0 0.0
    %753 = vmatpush.msra.mxu0 0.0
    %754 = vmatpush.msra.mxu0 0.0
    %755 = vmatpush.msra.mxu0 0.0
    %756 = vmatpush.msra.mxu0 0.0
    %757 = vmatpush.msra.mxu0 0.0
    %758 = vmatpush.msra.mxu0 0.0
    %759 = vmatpush.msra.mxu0 0.0
    %760 = vmatpush.msra.mxu0 0.0
    %761 = vmatpush.msra.mxu0 %v675
    %762 = vmatmul.f32.gmra.mxu0 %v660
    %v763 = vpop.f32.mrf.mxu0
    %v764 = vadd.f32 0.0, %v763
    %765 = vmatmul.f32.gmra.mxu0 %v663
    %v766 = vpop.f32.mrf.mxu0
    %v767 = vadd.f32 0.0, %v766
    %768 = vdwg.mxu0
    %v769 = vld [vmem:[%s8] sm:$0xff]
    %v770 = vld [vmem:[%s8 + $0x8] sm:$0xff]
    %v771 = vld [vmem:[%s9] sm:$0xff]
    %v772 = vld [vmem:[%s9 + $0x8] sm:$0xff]
    %v773 = vadd.f32 %v695, %v718
    %v774 = vadd.f32 %v773, %v741
    %v775 = vadd.f32 %v774, %v764
    %776 = vadd.xlane.f32.xlu0 %v775
    %v777 = vpop.xlane.xlu0 %776
    %v778 = vadd.f32 %v698, %v721
    %v779 = vadd.f32 %v778, %v744
    %v780 = vadd.f32 %v779, %v767
    %781 = vadd.xlane.f32.xlu0 %v780
    %v782 = vpop.xlane.xlu0 %781
    %v783 = vmul.f32 %v777, 0.001953125
    %v784 = vmul.f32 %v782, 0.001953125
    %v785 = vsub.f32 %v695, %v783
    %v786 = vsub.f32 %v718, %v783
    %v787 = vsub.f32 %v741, %v783
    %v788 = vsub.f32 %v764, %v783
    %v789 = vsub.f32 %v698, %v784
    %v790 = vsub.f32 %v721, %v784
    %v791 = vsub.f32 %v744, %v784
    %v792 = vsub.f32 %v767, %v784
    %v793 = vmul.f32 %v785, %v785
    %v794 = vmul.f32 %v786, %v786
    %v795 = vmul.f32 %v787, %v787
    %v796 = vmul.f32 %v788, %v788
    %v797 = vmul.f32 %v789, %v789
    %v798 = vmul.f32 %v790, %v790
    %v799 = vmul.f32 %v791, %v791
    %v800 = vmul.f32 %v792, %v792
    %v801 = vadd.f32 %v793, %v794
    %v802 = vadd.f32 %v801, %v795
    %v803 = vadd.f32 %v802, %v796
    %804 = vadd.xlane.f32.xlu0 %v803
    %v805 = vpop.xlane.xlu0 %804
    %v806 = vadd.f32 %v797, %v798
    %v807 = vadd.f32 %v806, %v799
    %v808 = vadd.f32 %v807, %v800
    %809 = vadd.xlane.f32.xlu0 %v808
    %v810 = vpop.xlane.xlu0 %809
    %v811 = vmul.f32 %v805, 0.001953125
    %v812 = vmul.f32 %v810, 0.001953125
    %v813 = vadd.f32 %v811, 1e-05
    %v814 = vadd.f32 %v812, 1e-05
    %v815 = vrsqrt.pop %v813
    %v816 = vmul.f32 %v815, %v813
    %v817 = vmul.f32 %v816, %v815
    %v818 = vmul.f32 0.5, %v817
    %v819 = vsub.f32 1.5, %v818
    %v820 = vmul.f32 %v815, %v819
    %vm821 = vweird.f32 %v813
    %vm822 = vweird.f32 %v815
    %vm823 = vmor %vm821, %vm822
    %v824 = vsel %vm823, %v815, %v820
    %v825 = vrsqrt.pop %v814
    %v826 = vmul.f32 %v825, %v814
    %v827 = vmul.f32 %v826, %v825
    %v828 = vmul.f32 0.5, %v827
    %v829 = vsub.f32 1.5, %v828
    %v830 = vmul.f32 %v825, %v829
    %vm831 = vweird.f32 %v814
    %vm832 = vweird.f32 %v825
    %vm833 = vmor %vm831, %vm832
    %v834 = vsel %vm833, %v825, %v830
    %v835 = vmul.f32 %v769, %v824
    %v836 = vmul.f32 %v770, %v834
    %838 = vset.pattern.permute.xlu0 0
    %839 = vperm.xlu0 %838, %v835
    %v840 = vpop.permute.xlu0 %839
    %843 = vset.pattern.permute.xlu0 0
    %844 = vperm.xlu0 %843, %v836
    %v845 = vpop.permute.xlu0 %844
    %v847 = vmul.f32 %v785, %v840
    %v848 = vmul.f32 %v786, %v840
    %v849 = vmul.f32 %v787, %v840
    %v850 = vmul.f32 %v788, %v840
    %v851 = vmul.f32 %v789, %v845
    %v852 = vmul.f32 %v790, %v845
    %v853 = vmul.f32 %v791, %v845
    %v854 = vmul.f32 %v792, %v845
    %856 = vset.pattern.permute.xlu0 0
    %857 = vperm.xlu0 %856, %v771
    %v858 = vpop.permute.xlu0 %857
    %861 = vset.pattern.permute.xlu0 0
    %862 = vperm.xlu0 %861, %v772
    %v863 = vpop.permute.xlu0 %862
    %v865 = vadd.f32 %v847, %v858
    %v866 = vadd.f32 %v848, %v858
    %v867 = vadd.f32 %v849, %v858
    %v868 = vadd.f32 %v850, %v858
    %v869 = vadd.f32 %v851, %v863
    %v870 = vadd.f32 %v852, %v863
    %v871 = vadd.f32 %v853, %v863
    %v872 = vadd.f32 %v854, %v863
    %v873 = vadd.f32 %v865, %v55
    %v874 = vadd.f32 %v866, %v56
    %v875 = vadd.f32 %v867, %v57
    %v876 = vadd.f32 %v868, %v58
    %v877 = vadd.f32 %v869, %v59
    %v878 = vadd.f32 %v870, %v60
    %v879 = vadd.f32 %v871, %v61
    %v880 = vadd.f32 %v872, %v62
    %v881 = vmax.f32 %v873, 0.0
    %v882 = vmax.f32 %v874, 0.0
    %v883 = vmax.f32 %v875, 0.0
    %v884 = vmax.f32 %v876, 0.0
    %v885 = vmax.f32 %v877, 0.0
    %v886 = vmax.f32 %v878, 0.0
    %v887 = vmax.f32 %v879, 0.0
    %v888 = vmax.f32 %v880, 0.0
    %889 = vst [vmem:[#allocation6] sm:$0xff] %v881
    %890 = vst [vmem:[#allocation6 + $0x8] sm:$0xff] %v882
    %891 = vst [vmem:[#allocation6 + $0x10] sm:$0xff] %v883
    %892 = vst [vmem:[#allocation6 + $0x18] sm:$0xff] %v884
    %893 = vst [vmem:[#allocation6 + $0x20] sm:$0xff] %v885
    %894 = vst [vmem:[#allocation6 + $0x28] sm:$0xff] %v886
    %895 = vst [vmem:[#allocation6 + $0x30] sm:$0xff] %v887
    %896 = vst [vmem:[#allocation6 + $0x38] sm:$0xff] %v888
    // Predicated region
    $region50: #{tpu_custom_call.1} parent=1 // pred_check
      _
    $region51: #{tpu_custom_call.1} parent=1 // pred_check_branch
      %898 = sbr.rel (0) target = $region53
    $region52: #{tpu_custom_call.1} parent=1 // pred_region
      %900 = vsyncadd [#allocation5], 0
      %s901 = sshll.u32 [#allocation6], 4
      %s902 = int_to_ptr.vmem [resolvable:$true] %s901
      %s903 = sshll.u32 %s11, 4
      %s904 = int_to_ptr.hbm [resolvable:$true] %s903
      %909 = dma.vmem_to_hbm [thread:$0]  %s902, 1024, %s904, [#allocation5], 512, 512, 32
    $region53: #{tpu_custom_call.1} parent=1 // pred_fallthru
      _
    // Predicated region
    $region54: #{tpu_custom_call.1} parent=1 // pred_check
      _
    $region55: #{tpu_custom_call.1} parent=1 // pred_check_branch
      %911 = sbr.rel (0) target = $region57
    $region56: #{tpu_custom_call.1} parent=1 // pred_region
      %913 = dma.done [#allocation5], 1024
    $region57: #{tpu_custom_call.1} parent=1 // pred_fallthru
      _
    %914 = vsyncpa [#allocation4], 1
    %915 = vsyncpa [#allocation5], 1

</llo_original>
